<compile_context>
chip_gen: v6e
topology: v6e:2x2x1
jax: 0.10.0
libtpu: 0.0.40
codegen_flags: <defaults>
</compile_context>

<pallas_src>
import functools

import jax
import jax.numpy as jnp
from jax.experimental import pallas as pl
from jax.experimental.pallas import tpu as pltpu

GAMMA = 1  # FocalLoss(gamma=1); handled as a direct multiply below.


def _focal_partial_sum_kernel(cos_ref, lab_ref, out_ref, *, n_valid):
    """Accumulates the sum of per-row focal losses for this partition's tiles."""
    i = pl.program_id(1)  # tile index within this partition ("arbitrary" axis)

    @pl.when(i == 0)
    def _():
        out_ref[...] = jnp.zeros_like(out_ref)

    x = cos_ref[...].astype(jnp.float32)            # (TN, C)
    lab = lab_ref[...]                              # (TN, 1) int32
    tn = x.shape[0]

    # Numerically-stable softmax pieces (all reductions are per-row, so garbage
    # rows from ragged boundary / duplicated tiles stay confined to their row).
    m = jnp.max(x, axis=-1, keepdims=True)          # (TN, 1)
    e = jnp.exp(x - m)                              # (TN, C)
    s = jnp.sum(e, axis=-1, keepdims=True)          # (TN, 1)

    # Gather the target logit via a one-hot lane mask (single masked reduction).
    col = jax.lax.broadcasted_iota(jnp.int32, x.shape, 1)
    tgt = jnp.sum(jnp.where(col == lab, x, 0.0), axis=-1, keepdims=True)  # (TN,1)

    # CrossEntropy(reduction='none') per row; clamp tiny negative round-off.
    ce = jnp.maximum(jnp.log(s) + m - tgt, 0.0)
    # p = softmax(x)[target] = exp(-ce): one column EUP exp, exact and <= 1.
    p = jnp.exp(-ce)
    loss = (1.0 - p) * ce                           # gamma == 1

    # Mask rows past the true batch size (ragged boundary block and/or the
    # clamped duplicate tile when partitions over-cover).  Select, not multiply,
    # so NaN/inf from garbage rows cannot leak in.
    tile = pl.program_id(0) * pl.num_programs(1) + i
    row = tile * tn + jax.lax.broadcasted_iota(jnp.int32, (tn, 1), 0)
    loss = jnp.where(row < n_valid, loss, 0.0)

    out_ref[...] += jnp.sum(loss).reshape(1, 1, 1)


def custom_softmax(cosine, label, *, num_partitions=None, tile_rows=None):
    """cosine: (N, C) float logits, label: (N,) int class indices -> scalar f32."""
    n, c = cosine.shape
    orig_n = n

    itemsize = jnp.dtype(cosine.dtype).itemsize
    align = max(8, 32 // itemsize)  # sublane packing: 8 (f32), 16 (bf16), 32 (8-bit)

    # Tiny-batch fallback only: pad to one sublane-aligned block (< align rows,
    # negligible).  Large N is never padded/copied.
    if n < align:
        pad = align - n
        cosine = jnp.pad(cosine, ((0, pad), (0, 0)))
        label = jnp.pad(label, (0, pad))
        n = align

    lab2d = label.astype(jnp.int32).reshape(n, 1)

    # 2-way row partition only where there are 2 TensorCores (v7x).
    if num_partitions is None:
        try:
            kind = jax.devices()[0].device_kind.lower()
        except Exception:  # pragma: no cover - defensive
            kind = ""
        num_partitions = 2 if ("v7" in kind or "7x" in kind) else 1

    vmem_limit_bytes = 48 * 1024 * 1024  # <= v7x 64 MiB physical; >> v5e/v6e defaults

    if tile_rows is None:
        # Live bytes per tile row (conservative):
        #   double-buffered logits block            : 2 * c * itemsize
        #   f32 upcast x, exp tile, iota, one-hot   : ~4 * c * 4
        #   (tn,1) column temps + label buffers lane-padded to 128: ~8 * 512
        per_row = c * (2 * itemsize + 16) + 8 * 512
        budget = 24 * 1024 * 1024  # target live set; ~2x headroom under vmem_limit
        tile_rows = budget // per_row
        if tile_rows < align:
            # TODO(synk): very wide class dim needs a C-chunked online-softmax
            # variant; not implemented here.
            raise ValueError(
                f"num_classes={c} too large for a single row-tile kernel")
    tn = max(align, (min(tile_rows, n) // align) * align)

    tiles_total = pl.cdiv(n, tn)
    num_parts = max(1, min(num_partitions, tiles_total))
    tiles_per_part = pl.cdiv(tiles_total, num_parts)
    last_tile = tiles_total - 1

    def tile_map(pp, i):
        # Partitions may over-cover by one tile when tiles_total % num_parts != 0;
        # clamp so the DMA stays in (boundary-block) bounds.  The duplicated tile
        # is fully masked out in the kernel via the logical row index.
        t = jnp.minimum(pp * tiles_per_part + i, last_tile)
        return (t, 0)

    kernel = functools.partial(_focal_partial_sum_kernel, n_valid=orig_n)

    partials = pl.pallas_call(
        kernel,
        out_shape=jax.ShapeDtypeStruct((num_parts, 1, 1), jnp.float32),
        grid=(num_parts, tiles_per_part),
        in_specs=[
            pl.BlockSpec((tn, c), tile_map),
            pl.BlockSpec((tn, 1), tile_map),
        ],
        out_specs=pl.BlockSpec((1, 1, 1), lambda pp, i: (pp, 0, 0)),
        compiler_params=pltpu.CompilerParams(
            dimension_semantics=("parallel", "arbitrary"),
            vmem_limit_bytes=vmem_limit_bytes),
        cost_estimate=pl.CostEstimate(
            flops=8 * n * c,
            transcendentals=n * c + 2 * n,
            bytes_accessed=n * c * itemsize + n * 4 + num_parts * 4),
    )(cosine, lab2d)

    return jnp.sum(partials) / orig_n


def _reference(cosine, label):
    xf = cosine.astype(jnp.float32)
    n = cosine.shape[0]
    lse = jax.nn.logsumexp(xf, axis=-1)
    ce = lse - xf[jnp.arange(n), label]
    prob = jnp.exp(-ce)
    return jnp.mean((1.0 - prob) ** GAMMA * ce)


if __name__ == "__main__":
    key = jax.random.PRNGKey(0)
    ks = jax.random.split(key, 8)

    # Case 1: small shape, single tile / single partition.
    N1, C1 = 8, 32
    cos1 = jax.random.normal(ks[0], (N1, C1), dtype=jnp.float32)
    lab1 = jax.random.randint(ks[1], (N1,), 0, C1, dtype=jnp.int32)
    loss1 = custom_softmax(cos1, lab1)
    jax.block_until_ready(loss1)
    ref1 = _reference(cos1, lab1)
    assert jnp.allclose(loss1, ref1, atol=2e-3, rtol=2e-3), (loss1, ref1)

    # Case 2: N not a multiple of the tile, forced 2-way partition -> exercises
    # ragged boundary block, accumulator init/accumulate, index clamp and
    # padded-row masking with NO wrapper-side pad of the logits.
    N2, C2 = 50, 32
    cos2 = jax.random.normal(ks[2], (N2, C2), dtype=jnp.float32)
    lab2 = jax.random.randint(ks[3], (N2,), 0, C2, dtype=jnp.int32)
    loss2 = custom_softmax(cos2, lab2, tile_rows=8, num_partitions=2)
    jax.block_until_ready(loss2)
    ref2 = _reference(cos2, lab2)
    assert jnp.allclose(loss2, ref2, atol=2e-3, rtol=2e-3), (loss2, ref2)

    # Case 3: tiny batch (N < sublane alignment) -> padded-to-one-block path.
    N3, C3 = 5, 16
    cos3 = jax.random.normal(ks[4], (N3, C3), dtype=jnp.float32)
    lab3 = jax.random.randint(ks[5], (N3,), 0, C3, dtype=jnp.int32)
    loss3 = custom_softmax(cos3, lab3)
    jax.block_until_ready(loss3)
    ref3 = _reference(cos3, lab3)
    assert jnp.allclose(loss3, ref3, atol=2e-3, rtol=2e-3), (loss3, ref3)

    # Case 4: bf16 logits on the wire, upcast in-kernel; 16-row sublane packing.
    N4, C4 = 48, 64
    cos4 = jax.random.normal(ks[6], (N4, C4), dtype=jnp.bfloat16)
    lab4 = jax.random.randint(ks[7], (N4,), 0, C4, dtype=jnp.int32)
    loss4 = custom_softmax(cos4, lab4)
    jax.block_until_ready(loss4)
    ref4 = _reference(cos4, lab4)
    assert jnp.allclose(loss4, ref4, atol=5e-3, rtol=5e-3), (loss4, ref4)

    print("KERNEL_OK")
</pallas_src>

<mosaic_0001>
module attributes {stable_mosaic.version = 11 : i64} {
  func.func @_focal_partial_sum_kernel(%arg0: i32, %arg1: i32, %arg2: memref<8x32xf32, #tpu.memory_space<vmem>>, %arg3: memref<8x1xi32, #tpu.memory_space<vmem>>, %arg4: memref<1x1x1xf32, #tpu.memory_space<vmem>>) attributes {dimension_semantics = [#tpu.dimension_semantics<parallel>, #tpu.dimension_semantics<arbitrary>], iteration_bounds = array<i64: 1, 1>, scalar_prefetch = 0 : i64, scratch_operands = 0 : i64, tpu.core_type = #tpu.core_type<tc>, window_params = [{transform_indices = @transform_0, window_bounds = array<i64: 8, 32>}, {transform_indices = @transform_1, window_bounds = array<i64: 8, 1>}, {transform_indices = @transform_2, window_bounds = array<i64: 1, 1, 1>}]} {
    %c0_i32 = arith.constant 0 : i32
    %0 = arith.cmpi eq, %arg1, %c0_i32 : i32
    %1 = arith.extui %0 : i1 to i32
    %c0_i32_0 = arith.constant 0 : i32
    %2 = arith.cmpi ne, %1, %c0_i32_0 : i32
    scf.if %2 {
      %cst_19 = arith.constant 0.000000e+00 : f32
      %48 = vector.broadcast %cst_19 : f32 to vector<1x1x1xf32>
      %c0_20 = arith.constant 0 : index
      %c0_21 = arith.constant 0 : index
      %c0_22 = arith.constant 0 : index
      %49 = vector.load %arg4[%c0_20, %c0_21, %c0_22] : memref<1x1x1xf32, #tpu.memory_space<vmem>>, vector<1x1x1xf32>
      tpu.vector_store %arg4[%c0_20, %c0_21, %c0_22], %48 {strides = array<i32>} : memref<1x1x1xf32, #tpu.memory_space<vmem>>, vector<1x1x1xf32>,
    } else {
    }
    %c0 = arith.constant 0 : index
    %c0_1 = arith.constant 0 : index
    %3 = vector.load %arg2[%c0, %c0_1] : memref<8x32xf32, #tpu.memory_space<vmem>>, vector<8x32xf32>
    %c0_2 = arith.constant 0 : index
    %c0_3 = arith.constant 0 : index
    %4 = vector.load %arg3[%c0_2, %c0_3] : memref<8x1xi32, #tpu.memory_space<vmem>>, vector<8x1xi32>
    %cst = arith.constant dense<0xFF800000> : vector<8xf32>
    %5 = vector.multi_reduction <maximumf>, %3, %cst [1] : vector<8x32xf32> to vector<8xf32>
    %6 = vector.shape_cast %5 : vector<8xf32> to vector<8x1xf32>
    %7 = vector.broadcast %6 : vector<8x1xf32> to vector<8x32xf32>
    %8 = arith.subf %3, %7 : vector<8x32xf32>
    %9 = math.exp %8 : vector<8x32xf32>
    %cst_4 = arith.constant dense<0.000000e+00> : vector<8xf32>
    %10 = vector.multi_reduction <add>, %9, %cst_4 [1] : vector<8x32xf32> to vector<8xf32>
    %11 = vector.shape_cast %10 : vector<8xf32> to vector<8x1xf32>
    %12 = tpu.iota {dimensions = array<i32: 1>} : vector<8x32xi32>
    %13 = vector.broadcast %4 : vector<8x1xi32> to vector<8x32xi32>
    %14 = arith.cmpi eq, %12, %13 : vector<8x32xi32>
    %cst_5 = arith.constant 0.000000e+00 : f32
    %15 = vector.broadcast %cst_5 : f32 to vector<8x32xf32>
    %16 = arith.select %14, %3, %15 : vector<8x32xi1>, vector<8x32xf32>
    %cst_6 = arith.constant dense<0.000000e+00> : vector<8xf32>
    %17 = vector.multi_reduction <add>, %16, %cst_6 [1] : vector<8x32xf32> to vector<8xf32>
    %18 = vector.shape_cast %17 : vector<8xf32> to vector<8x1xf32>
    %19 = math.log %11 : vector<8x1xf32>
    %20 = arith.addf %19, %6 : vector<8x1xf32>
    %21 = arith.subf %20, %18 : vector<8x1xf32>
    %cst_7 = arith.constant 0.000000e+00 : f32
    %22 = vector.broadcast %cst_7 : f32 to vector<8x1xf32>
    %23 = arith.maximumf %21, %22 : vector<8x1xf32>
    %cst_8 = arith.constant 0.000000e+00 : f32
    %24 = vector.broadcast %cst_8 : f32 to vector<8x1xf32>
    %25 = arith.subf %24, %23 : vector<8x1xf32>
    %26 = math.exp %25 : vector<8x1xf32>
    %cst_9 = arith.constant 1.000000e+00 : f32
    %27 = vector.broadcast %cst_9 : f32 to vector<8x1xf32>
    %28 = arith.subf %27, %26 : vector<8x1xf32>
    %29 = arith.mulf %28, %23 : vector<8x1xf32>
    %c1_i32 = arith.constant 1 : i32
    %30 = arith.muli %arg0, %c1_i32 : i32
    %31 = arith.addi %30, %arg1 : i32
    %c8_i32 = arith.constant 8 : i32
    %32 = arith.muli %31, %c8_i32 : i32
    %33 = tpu.iota {dimensions = array<i32: 0>} : vector<8x1xi32>
    %34 = vector.broadcast %32 : i32 to vector<8x1xi32>
    %35 = arith.addi %34, %33 : vector<8x1xi32>
    %c8_i32_10 = arith.constant 8 : i32
    %36 = vector.broadcast %c8_i32_10 : i32 to vector<8x1xi32>
    %37 = arith.cmpi slt, %35, %36 : vector<8x1xi32>
    %cst_11 = arith.constant 0.000000e+00 : f32
    %38 = vector.broadcast %cst_11 : f32 to vector<8x1xf32>
    %39 = arith.select %37, %29, %38 : vector<8x1xi1>, vector<8x1xf32>
    %c0_12 = arith.constant 0 : index
    %c0_13 = arith.constant 0 : index
    %c0_14 = arith.constant 0 : index
    %40 = vector.load %arg4[%c0_12, %c0_13, %c0_14] : memref<1x1x1xf32, #tpu.memory_space<vmem>>, vector<1x1x1xf32>
    %41 = vector.shape_cast %39 : vector<8x1xf32> to vector<1x8x1xf32>
    %cst_15 = arith.constant dense<0.000000e+00> : vector<1xf32>
    %42 = vector.multi_reduction <add>, %41, %cst_15 [1, 2] : vector<1x8x1xf32> to vector<1xf32>
    %43 = vector.shape_cast %42 : vector<1xf32> to vector<1x1x1xf32>
    %44 = vector.extract %43[0, 0, 0] : f32 from vector<1x1x1xf32>
    %45 = vector.broadcast %44 : f32 to vector<1x1x1xf32>
    %46 = arith.addf %40, %45 : vector<1x1x1xf32>
    %c0_16 = arith.constant 0 : index
    %c0_17 = arith.constant 0 : index
    %c0_18 = arith.constant 0 : index
    %47 = vector.load %arg4[%c0_16, %c0_17, %c0_18] : memref<1x1x1xf32, #tpu.memory_space<vmem>>, vector<1x1x1xf32>
    tpu.vector_store %arg4[%c0_16, %c0_17, %c0_18], %46 {strides = array<i32>} : memref<1x1x1xf32, #tpu.memory_space<vmem>>, vector<1x1x1xf32>,
    return
  }
  func.func @transform_0(%arg0: i32, %arg1: i32) -> (i32, i32) {
    %c1_i32 = arith.constant 1 : i32
    %0 = arith.muli %arg0, %c1_i32 : i32
    %1 = arith.addi %0, %arg1 : i32
    %c0_i32 = arith.constant 0 : i32
    %2 = arith.minsi %1, %c0_i32 : i32
    %c0_i32_0 = arith.constant 0 : i32
    %c0_i32_1 = arith.constant 0 : i32
    return %2, %c0_i32_0 : i32, i32
  }
  func.func @transform_1(%arg0: i32, %arg1: i32) -> (i32, i32) {
    %c1_i32 = arith.constant 1 : i32
    %0 = arith.muli %arg0, %c1_i32 : i32
    %1 = arith.addi %0, %arg1 : i32
    %c0_i32 = arith.constant 0 : i32
    %2 = arith.minsi %1, %c0_i32 : i32
    %c0_i32_0 = arith.constant 0 : i32
    %c0_i32_1 = arith.constant 0 : i32
    return %2, %c0_i32_0 : i32, i32
  }
  func.func @transform_2(%arg0: i32, %arg1: i32) -> (i32, i32, i32) {
    %c0_i32 = arith.constant 0 : i32
    %c0_i32_0 = arith.constant 0 : i32
    %c0_i32_1 = arith.constant 0 : i32
    return %arg0, %c0_i32, %c0_i32_0 : i32, i32, i32
  }
}

</mosaic_0001>

<llo_original>
// kernel: tpu_custom_call.1
$region0: #{tpu_custom_call.1}
  #allocation0 [shape = 'u32[]', space=smem, size = 0x4, offset = 0x4, fixed_abs, tag = 'smem constant byte address 0x4 - core index']
  #allocation1 [shape = 'u32[144,128]{1,0:T(1,128)}', space=vmem, size = 0x12000, scoped, tag = 'internal scratch']
  %s0 = inlined_call_operand.vmem [shape: f32[8,32], index: 0, kind: input, shape index: {}]
  %s1 = inlined_call_operand.vmem [shape: s32[8,1], index: 1, kind: input, shape index: {}]
  %s2 = inlined_call_operand.hbm [shape: f32[1,1,1], index: 2, kind: output, shape index: {}]
  %s3 = sld [smem:[#allocation0]]
  $region22: #{tpu_custom_call.1} parent=0
    _
  %s5 = ssub.s32 1, %s3
  %s6 = scalar_select 0, %s5, %s3
  $region1: #{tpu_custom_call.1} parent=0
    #allocation2 [shape = 'u8[512]{0}', space=vmem, size = 0x400, scoped, tag = 'output window, operand 0, single buffered']
    #allocation3 [shape = 's32[1]{0}', space=sflag, size = 0x4, scoped, tag = 'scoped memory for tpu_custom_call.1']
    %7 = vsyncpa [#allocation3], 0
    // Predicated region
    $region2: #{tpu_custom_call.1} parent=1 // pred_check
      _
    $region3: #{tpu_custom_call.1} parent=1 // pred_check_branch
      %9 = sbr.rel (0) target = $region5
    $region4: #{tpu_custom_call.1} parent=1 // pred_region
      %s10 = sadd.s32 0, 0
      %p11 = scmp.lt.s32.totalorder %s10, 0
      %s12 = scalar_select %p11, %s10, 0
      %p13 = scmp.lt.s32.totalorder %s12, 0
      %s14 = scalar_select %p13, %s12, 0
      %s15 = smul.addr %s14, 8
      %s16 = scalar_lea.vmem %s0, %s15
      %s17 = sadd.s32 0, 0
      %p18 = scmp.lt.s32.totalorder %s17, 0
      %s19 = scalar_select %p18, %s17, 0
    $region5: #{tpu_custom_call.1} parent=1 // pred_fallthru
      _
    // Predicated region
    $region6: #{tpu_custom_call.1} parent=1 // pred_check
      _
    $region7: #{tpu_custom_call.1} parent=1 // pred_check_branch
      %21 = sbr.rel (0) target = $region9
    $region8: #{tpu_custom_call.1} parent=1 // pred_region
      %s22 = sadd.s32 0, 0
      %p23 = scmp.lt.s32.totalorder %s22, 0
      %s24 = scalar_select %p23, %s22, 0
      %p25 = scmp.lt.s32.totalorder %s24, 0
      %s26 = scalar_select %p25, %s24, 0
      %s27 = smul.addr %s26, 8
      %s28 = scalar_lea.vmem %s1, %s27
      %s29 = sadd.s32 0, 0
      %p30 = scmp.lt.s32.totalorder %s29, 0
      %s31 = scalar_select %p30, %s29, 0
    $region9: #{tpu_custom_call.1} parent=1 // pred_fallthru
      _
    %s32 = sadd.s32 0, 0
    %p33 = scmp.lt.s32.totalorder %s32, 0
    %s34 = scalar_select %p33, %s32, 0
    %p35 = scmp.lt.s32.totalorder %s34, 0
    %s36 = scalar_select %p35, %s34, 0
    %s37 = smul.addr %s36, 8
    %s38 = scalar_lea.vmem %s0, %s37
    %s39 = sadd.s32 0, 0
    %p40 = scmp.lt.s32.totalorder %s39, 0
    %s41 = scalar_select %p40, %s39, 0
    %p42 = scmp.lt.s32.totalorder %s41, 0
    %s43 = scalar_select %p42, %s41, 0
    %s44 = smul.addr %s43, 8
    %s45 = scalar_lea.vmem %s1, %s44
    %s46 = sadd.s32 0, 0
    %p47 = scmp.lt.s32.totalorder %s46, 0
    %s48 = scalar_select %p47, %s46, 0
    %p49 = scmp.lt.s32.totalorder %s48, 0
    %s50 = scalar_select %p49, %s48, 0
    %s51 = smul.addr %s50, 8
    %s52 = scalar_lea.vmem %s0, %s51
    %s53 = sadd.s32 0, 0
    %p54 = scmp.lt.s32.totalorder %s53, 0
    %s55 = scalar_select %p54, %s53, 0
    %s56 = sadd.s32 0, 0
    %p57 = scmp.lt.s32.totalorder %s56, 0
    %s58 = scalar_select %p57, %s56, 0
    %p59 = scmp.lt.s32.totalorder %s58, 0
    %s60 = scalar_select %p59, %s58, 0
    %s61 = smul.addr %s60, 8
    %s62 = scalar_lea.vmem %s1, %s61
    %s63 = sadd.s32 0, 0
    %p64 = scmp.lt.s32.totalorder %s63, 0
    %s65 = scalar_select %p64, %s63, 0
    %p66 = scmp.eq.s32.totalorder 0, 0
    // Predicated region
    $region10: #{tpu_custom_call.1} parent=1 // pred_check
      %p67 = pneg %p66
    $region11: #{tpu_custom_call.1} parent=1 // pred_check_branch
      %69 = sbr.rel (%p67) target = $region13
    $region12: #{tpu_custom_call.1} parent=1 // pred_region
      %vm70 = vcmask 0
      %71 = vst.msk [vmem:[#allocation2] sm:$0x1] %vm70, 0.0
    $region13: #{tpu_custom_call.1} parent=1 // pred_fallthru
      _
    %v72 = vld [vmem:[%s52] sm:$0xff]
    %v73 = vld [vmem:[%s62] sm:$0xff]
    %vm74 = vcmask 261120
    %v75 = vsel %vm74, %v72, -inf
    %76 = vmax.xlane.f32.xlu0 %v75
    %v77 = vpop.xlane.xlu0 %76
    %v78 = vsub.f32 %v72, %v77
    %v79 = vmul.f32 %v78, 1.442695
    %v80 = vpow.pop %v79
    %v81 = vsel %vm74, %v80, 0.0
    %82 = vadd.xlane.f32.xlu0 %v81
    %v83 = vpop.xlane.xlu0 %82
    %v84 = vlaneseq
    %v85 = vand.u32 %v84, 127
    %86 = vset.pattern.permute.xlu0 0
    %87 = vperm.xlu0 %86, %v73
    %v88 = vpop.permute.xlu0 %87
    %vm89 = vcmp.eq.s32.totalorder %v85, %v88
    %v90 = vsel %vm89, %v72, 0.0
    %v91 = vsel %vm74, %v90, 0.0
    %92 = vadd.xlane.f32.xlu0 %v91
    %v93 = vpop.xlane.xlu0 %92
    %v94 = vlog2.pop %v83
    %v95 = vmul.f32 %v94, 0.6931472
    %v96 = vadd.f32 %v95, %v77
    %v97 = vsub.f32 %v96, %v93
    %v98 = vmax.f32 %v97, 0.0
    %v99 = vsub.f32 0.0, %v98
    %v100 = vmul.f32 %v99, 1.442695
    %v101 = vpow.pop %v100
    %v102 = vsub.f32 1.0, %v101
    %v103 = vmul.f32 %v102, %v98
    %s104 = sadd.s32 0, 0
    %s105 = smul.u32 %s104, 8
    %v106 = vlaneseq
    %v107 = vshrl.u32 %v106, 7
    %v108 = vstv %s105
    %v109 = vadd.s32 %v108, %v107
    %vm110 = vcmp.lt.s32.totalorder %v109, 8
    %v111 = vsel %vm110, %v103, 0.0
    %v112 = vld [vmem:[#allocation2] sm:$0x1]
    %vm113 = vcmask 7168
    %v114 = vsel %vm113, %v111, 0.0
    %115 = vadd.xlane.f32.xlu0 %v114
    %v116 = vpop.xlane.xlu0 %115
    %v117 = vrot.slane %v116, 4
    %v118 = vadd.f32 %v116, %v117
    %v119 = vrot.slane %v118, 2
    %v120 = vadd.f32 %v118, %v119
    %v121 = vrot.slane %v120, 1
    %v122 = vadd.f32 %v120, %v121
    %s123 = vtos %v122
    %v124 = vstv %s123
    %v125 = vadd.f32 %v112, %v124
    %vm126 = vcmask 0
    %127 = vst.msk [vmem:[#allocation2] sm:$0x1] %vm126, %v125
    // Predicated region
    $region14: #{tpu_custom_call.1} parent=1 // pred_check
      _
    $region15: #{tpu_custom_call.1} parent=1 // pred_check_branch
      %129 = sbr.rel (0) target = $region17
    $region16: #{tpu_custom_call.1} parent=1 // pred_region
      %s131 = ssub.s32 16, 16
      %132 = vsyncadd [#allocation3], %s131
      %s134 = sshll.u32 [#allocation2], 4
      %s135 = int_to_ptr.vmem [resolvable:$true] %s134
      %137 = dma.vmem_to_hbm [thread:$0]  %s135, 16, %s2, [#allocation3]
    $region17: #{tpu_custom_call.1} parent=1 // pred_fallthru
      _
    // Predicated region
    $region18: #{tpu_custom_call.1} parent=1 // pred_check
      _
    $region19: #{tpu_custom_call.1} parent=1 // pred_check_branch
      %139 = sbr.rel (0) target = $region21
    $region20: #{tpu_custom_call.1} parent=1 // pred_region
      %140 = dma.done [#allocation3], 16
    $region21: #{tpu_custom_call.1} parent=1 // pred_fallthru
      _
    %141 = vsyncpa [#allocation3], 1

</llo_original>
